<compile_context>
chip_gen: v7x
topology: tpu7x:2x2x1
jax: 0.10.0
libtpu: 0.0.40
codegen_flags: <defaults>
</compile_context>

<pallas_src>
import jax
import jax.numpy as jnp
from jax.experimental import pallas as pl
from jax.experimental.pallas import tpu as pltpu

# ---- model hyper-parameters (small, consistent with the module) ----
L_FIRST = 4          # input channels
SCI_L_SECOND = 32    # hidden width (== conv output channels == flatten size)
CLASSES = 10
BATCH = 8

OUT_PAD = 128        # lane-dense padded logits width (one full vreg lane row)
NEG_LARGE = -1e30    # mask value for padded logit lanes (kills them in logsumexp)
N_HIDDEN = 4         # conv-as-linear + 3 hidden Linear layers, all 32-wide


def cnn5_kernel(x_ref, w_ref, w4_ref, b_ref, out_ref):
    """Whole CNN5 forward in one grid-less invocation (operands VMEM-resident).

    x_ref  : (B, 32)      f32   input, zero-padded from L_FIRST=4 lanes
    w_ref  : (4, 32, 32)  bf16  stacked (in, out) weights: [conv1x1(padded), fc1, fc2, fc3]
    w4_ref : (32, 128)    bf16  final (in, out) weight, zero-padded cols CLASSES..127
    b_ref  : (8, 128)     f32   packed biases; rows 0..3 hidden biases (first 32 lanes),
                                row 4 final bias with lanes CLASSES..127 = -1e30
    out_ref: (B, 128)     f32   lane-dense padded log-softmax output
    """
    h = x_ref[...]                                       # f32 activations
    for k in range(N_HIDDEN):                            # short static loop -> unrolled
        z = jnp.dot(h.astype(jnp.bfloat16), w_ref[k],
                    preferred_element_type=jnp.float32)  # MXU, bf16 operands, f32 acc
        z = z + b_ref[k, 0:SCI_L_SECOND]
        h = jnp.maximum(z, 0.0)                          # ReLU (Dropout = identity)

    # final Linear -> padded 128-wide logits; padded lanes carry -1e30 bias
    logits = jnp.dot(h.astype(jnp.bfloat16), w4_ref[...],
                     preferred_element_type=jnp.float32) + b_ref[4, :]

    # numerically stable log-softmax over lanes; exp(-1e30 - m) == 0 for pad lanes
    m = jnp.max(logits, axis=-1, keepdims=True)
    zc = logits - m
    lse = jnp.log(jnp.sum(jnp.exp(zc), axis=-1, keepdims=True))
    out_ref[...] = zc - lse


def init_params(key):
    """Xavier-uniform weights (PyTorch shapes), small random biases."""
    def xavier(k, fan_in, fan_out):
        limit = jnp.sqrt(6.0 / (fan_in + fan_out))
        return jax.random.uniform(k, (fan_out, fan_in), jnp.float32, -limit, limit)

    ks = jax.random.split(key, 10)
    wc = xavier(ks[0], L_FIRST, SCI_L_SECOND)      # conv weight (out, in) [1x1 squeezed]
    w1 = xavier(ks[1], SCI_L_SECOND, SCI_L_SECOND)
    w2 = xavier(ks[2], SCI_L_SECOND, SCI_L_SECOND)
    w3 = xavier(ks[3], SCI_L_SECOND, SCI_L_SECOND)
    w4 = xavier(ks[4], SCI_L_SECOND, CLASSES)
    bc = jax.random.uniform(ks[5], (SCI_L_SECOND,), jnp.float32, -0.1, 0.1)
    b1 = jax.random.uniform(ks[6], (SCI_L_SECOND,), jnp.float32, -0.1, 0.1)
    b2 = jax.random.uniform(ks[7], (SCI_L_SECOND,), jnp.float32, -0.1, 0.1)
    b3 = jax.random.uniform(ks[8], (SCI_L_SECOND,), jnp.float32, -0.1, 0.1)
    b4 = jax.random.uniform(ks[9], (CLASSES,), jnp.float32, -0.1, 0.1)
    return dict(wc=wc, bc=bc, w1=w1, b1=b1, w2=w2, b2=b2,
                w3=w3, b3=b3, w4=w4, b4=b4)


def prepare_params(params):
    """One-time packing: transpose to (in,out), pad, stack, cast MXU operands to bf16."""
    # conv weight (out,in) -> (in,out), zero-pad input dim 4 -> 32 so it stacks.
    wc_p = jnp.zeros((SCI_L_SECOND, SCI_L_SECOND), jnp.float32)
    wc_p = wc_p.at[:L_FIRST, :].set(params["wc"].T)
    w_stack = jnp.stack([wc_p, params["w1"].T, params["w2"].T, params["w3"].T]
                        ).astype(jnp.bfloat16)                       # (4, 32, 32) bf16

    # final weight (out,in) -> (in,out), zero-pad N 10 -> 128 (lane-dense output)
    w4_p = jnp.zeros((SCI_L_SECOND, OUT_PAD), jnp.float32)
    w4_p = w4_p.at[:, :CLASSES].set(params["w4"].T)
    w4_p = w4_p.astype(jnp.bfloat16)                                 # (32, 128) bf16

    # pack all 5 biases into a single (8, 128) f32 tile (one DMA, one vreg)
    b_pack = jnp.zeros((8, OUT_PAD), jnp.float32)
    b_pack = b_pack.at[0, :SCI_L_SECOND].set(params["bc"])
    b_pack = b_pack.at[1, :SCI_L_SECOND].set(params["b1"])
    b_pack = b_pack.at[2, :SCI_L_SECOND].set(params["b2"])
    b_pack = b_pack.at[3, :SCI_L_SECOND].set(params["b3"])
    b_pack = b_pack.at[4, :].set(NEG_LARGE)          # mask padded logit lanes
    b_pack = b_pack.at[4, :CLASSES].set(params["b4"])
    return dict(w_stack=w_stack, w4=w4_p, b=b_pack)


def cnn5_forward(x_nchw, packed):
    """Returns (log_probs, x) exactly like the PyTorch forward."""
    N, C, H, W = x_nchw.shape
    assert C == L_FIRST and H == 1 and W == 1, "flatten must yield SCI_L_SECOND features"
    x2d = x_nchw.reshape(N, C).astype(jnp.float32)
    x_pad = jnp.pad(x2d, ((0, 0), (0, SCI_L_SECOND - C)))   # zero lanes x zero wc rows

    vmem = pl.BlockSpec(memory_space=pltpu.MemorySpace.VMEM)
    out_pad = pl.pallas_call(
        cnn5_kernel,
        out_shape=jax.ShapeDtypeStruct((N, OUT_PAD), jnp.float32),
        in_specs=[vmem, vmem, vmem, vmem],
        out_specs=vmem,
    )(x_pad, packed["w_stack"], packed["w4"], packed["b"])
    return out_pad[:, :CLASSES], x_nchw


# ---------------- pure-JAX references ----------------
def reference_forward_bf16(x_nchw, params):
    """Mirrors the kernel's numerics (bf16 MXU operands, f32 accumulation)."""
    def mm(a, w_pt):   # w_pt in PyTorch (out, in) layout
        return jnp.dot(a.astype(jnp.bfloat16), w_pt.T.astype(jnp.bfloat16),
                       preferred_element_type=jnp.float32)
    x = x_nchw.reshape(x_nchw.shape[0], -1).astype(jnp.float32)
    h = jax.nn.relu(mm(x, params["wc"]) + params["bc"])
    h = jax.nn.relu(mm(h, params["w1"]) + params["b1"])
    h = jax.nn.relu(mm(h, params["w2"]) + params["b2"])
    h = jax.nn.relu(mm(h, params["w3"]) + params["b3"])
    logits = mm(h, params["w4"]) + params["b4"]
    return jax.nn.log_softmax(logits, axis=1)


def reference_forward_f32(x_nchw, params):
    x = x_nchw.reshape(x_nchw.shape[0], -1).astype(jnp.float32)
    h = jax.nn.relu(x @ params["wc"].T + params["bc"])
    h = jax.nn.relu(h @ params["w1"].T + params["b1"])
    h = jax.nn.relu(h @ params["w2"].T + params["b2"])
    h = jax.nn.relu(h @ params["w3"].T + params["b3"])
    logits = h @ params["w4"].T + params["b4"]
    return jax.nn.log_softmax(logits, axis=1)


if __name__ == "__main__":
    key = jax.random.PRNGKey(0)
    kx, kp = jax.random.split(key)
    x = jax.random.normal(kx, (BATCH, L_FIRST, 1, 1), jnp.float32)
    params = init_params(kp)
    packed = prepare_params(params)          # one-time weight packing (not per call)

    out, x_ret = cnn5_forward(x, packed)
    jax.block_until_ready(out)
    jax.block_until_ready(x_ret)

    ref_bf16 = reference_forward_bf16(x, params)
    ref_f32 = reference_forward_f32(x, params)

    assert out.shape == (BATCH, CLASSES)
    assert x_ret.shape == x.shape
    # strict check vs a reference with identical (bf16-operand) numerics
    assert jnp.allclose(out, ref_bf16, atol=1e-3, rtol=1e-3), \
        float(jnp.max(jnp.abs(out - ref_bf16)))
    # loose check vs the full-f32 reference (bf16 weight quantization only)
    assert jnp.allclose(out, ref_f32, atol=1e-1, rtol=1e-1), \
        float(jnp.max(jnp.abs(out - ref_f32)))
    # log-softmax rows should sum to 1 in prob space
    assert jnp.allclose(jnp.sum(jnp.exp(out), axis=1), 1.0, atol=1e-4)

    print("KERNEL_OK")
</pallas_src>

<mosaic_0001>
module attributes {stable_mosaic.version = 11 : i64} {
  func.func @cnn5_kernel(%arg0: memref<8x32xf32, #tpu.memory_space<vmem>>, %arg1: memref<4x32x32xbf16, #tpu.memory_space<vmem>>, %arg2: memref<32x128xbf16, #tpu.memory_space<vmem>>, %arg3: memref<8x128xf32, #tpu.memory_space<vmem>>, %arg4: memref<8x128xf32, #tpu.memory_space<vmem>>) attributes {dimension_semantics = [], scalar_prefetch = 0 : i64, scratch_operands = 0 : i64, tpu.core_type = #tpu.core_type<tc>} {
    %c0 = arith.constant 0 : index
    %c0_0 = arith.constant 0 : index
    %0 = vector.load %arg0[%c0, %c0_0] : memref<8x32xf32, #tpu.memory_space<vmem>>, vector<8x32xf32>
    %1 = arith.truncf %0 : vector<8x32xf32> to vector<8x32xbf16>
    %c0_1 = arith.constant 0 : index
    %c0_2 = arith.constant 0 : index
    %c0_3 = arith.constant 0 : index
    %2 = vector.load %arg1[%c0_1, %c0_2, %c0_3] : memref<4x32x32xbf16, #tpu.memory_space<vmem>>, vector<1x32x32xbf16>
    %3 = vector.shape_cast %2 : vector<1x32x32xbf16> to vector<32x32xbf16>
    %cst = arith.constant dense<0.000000e+00> : vector<8x32xf32>
    %4 = tpu.matmul %1, %3, %cst {dimension_numbers = #tpu.dot_dimension_numbers<[1], [0], [0], [1], [0, 0, 1, 1], [], []>} : vector<8x32xbf16>, vector<32x32xbf16>, vector<8x32xf32> -> vector<8x32xf32>
    %c0_4 = arith.constant 0 : index
    %c0_5 = arith.constant 0 : index
    %5 = vector.load %arg3[%c0_4, %c0_5] : memref<8x128xf32, #tpu.memory_space<vmem>>, vector<1x32xf32>
    %6 = vector.shape_cast %5 : vector<1x32xf32> to vector<32xf32>
    %7 = vector.shape_cast %6 : vector<32xf32> to vector<1x32xf32>
    %8 = vector.broadcast %7 : vector<1x32xf32> to vector<8x32xf32>
    %9 = arith.addf %4, %8 : vector<8x32xf32>
    %cst_6 = arith.constant 0.000000e+00 : f32
    %10 = vector.broadcast %cst_6 : f32 to vector<8x32xf32>
    %11 = arith.maximumf %9, %10 : vector<8x32xf32>
    %12 = arith.truncf %11 : vector<8x32xf32> to vector<8x32xbf16>
    %c1 = arith.constant 1 : index
    %c0_7 = arith.constant 0 : index
    %c0_8 = arith.constant 0 : index
    %13 = vector.load %arg1[%c1, %c0_7, %c0_8] : memref<4x32x32xbf16, #tpu.memory_space<vmem>>, vector<1x32x32xbf16>
    %14 = vector.shape_cast %13 : vector<1x32x32xbf16> to vector<32x32xbf16>
    %cst_9 = arith.constant dense<0.000000e+00> : vector<8x32xf32>
    %15 = tpu.matmul %12, %14, %cst_9 {dimension_numbers = #tpu.dot_dimension_numbers<[1], [0], [0], [1], [0, 0, 1, 1], [], []>} : vector<8x32xbf16>, vector<32x32xbf16>, vector<8x32xf32> -> vector<8x32xf32>
    %c1_10 = arith.constant 1 : index
    %c0_11 = arith.constant 0 : index
    %16 = vector.load %arg3[%c1_10, %c0_11] : memref<8x128xf32, #tpu.memory_space<vmem>>, vector<1x32xf32>
    %17 = vector.shape_cast %16 : vector<1x32xf32> to vector<32xf32>
    %18 = vector.shape_cast %17 : vector<32xf32> to vector<1x32xf32>
    %19 = vector.broadcast %18 : vector<1x32xf32> to vector<8x32xf32>
    %20 = arith.addf %15, %19 : vector<8x32xf32>
    %cst_12 = arith.constant 0.000000e+00 : f32
    %21 = vector.broadcast %cst_12 : f32 to vector<8x32xf32>
    %22 = arith.maximumf %20, %21 : vector<8x32xf32>
    %23 = arith.truncf %22 : vector<8x32xf32> to vector<8x32xbf16>
    %c2 = arith.constant 2 : index
    %c0_13 = arith.constant 0 : index
    %c0_14 = arith.constant 0 : index
    %24 = vector.load %arg1[%c2, %c0_13, %c0_14] : memref<4x32x32xbf16, #tpu.memory_space<vmem>>, vector<1x32x32xbf16>
    %25 = vector.shape_cast %24 : vector<1x32x32xbf16> to vector<32x32xbf16>
    %cst_15 = arith.constant dense<0.000000e+00> : vector<8x32xf32>
    %26 = tpu.matmul %23, %25, %cst_15 {dimension_numbers = #tpu.dot_dimension_numbers<[1], [0], [0], [1], [0, 0, 1, 1], [], []>} : vector<8x32xbf16>, vector<32x32xbf16>, vector<8x32xf32> -> vector<8x32xf32>
    %c2_16 = arith.constant 2 : index
    %c0_17 = arith.constant 0 : index
    %27 = vector.load %arg3[%c2_16, %c0_17] : memref<8x128xf32, #tpu.memory_space<vmem>>, vector<1x32xf32>
    %28 = vector.shape_cast %27 : vector<1x32xf32> to vector<32xf32>
    %29 = vector.shape_cast %28 : vector<32xf32> to vector<1x32xf32>
    %30 = vector.broadcast %29 : vector<1x32xf32> to vector<8x32xf32>
    %31 = arith.addf %26, %30 : vector<8x32xf32>
    %cst_18 = arith.constant 0.000000e+00 : f32
    %32 = vector.broadcast %cst_18 : f32 to vector<8x32xf32>
    %33 = arith.maximumf %31, %32 : vector<8x32xf32>
    %34 = arith.truncf %33 : vector<8x32xf32> to vector<8x32xbf16>
    %c3 = arith.constant 3 : index
    %c0_19 = arith.constant 0 : index
    %c0_20 = arith.constant 0 : index
    %35 = vector.load %arg1[%c3, %c0_19, %c0_20] : memref<4x32x32xbf16, #tpu.memory_space<vmem>>, vector<1x32x32xbf16>
    %36 = vector.shape_cast %35 : vector<1x32x32xbf16> to vector<32x32xbf16>
    %cst_21 = arith.constant dense<0.000000e+00> : vector<8x32xf32>
    %37 = tpu.matmul %34, %36, %cst_21 {dimension_numbers = #tpu.dot_dimension_numbers<[1], [0], [0], [1], [0, 0, 1, 1], [], []>} : vector<8x32xbf16>, vector<32x32xbf16>, vector<8x32xf32> -> vector<8x32xf32>
    %c3_22 = arith.constant 3 : index
    %c0_23 = arith.constant 0 : index
    %38 = vector.load %arg3[%c3_22, %c0_23] : memref<8x128xf32, #tpu.memory_space<vmem>>, vector<1x32xf32>
    %39 = vector.shape_cast %38 : vector<1x32xf32> to vector<32xf32>
    %40 = vector.shape_cast %39 : vector<32xf32> to vector<1x32xf32>
    %41 = vector.broadcast %40 : vector<1x32xf32> to vector<8x32xf32>
    %42 = arith.addf %37, %41 : vector<8x32xf32>
    %cst_24 = arith.constant 0.000000e+00 : f32
    %43 = vector.broadcast %cst_24 : f32 to vector<8x32xf32>
    %44 = arith.maximumf %42, %43 : vector<8x32xf32>
    %45 = arith.truncf %44 : vector<8x32xf32> to vector<8x32xbf16>
    %c0_25 = arith.constant 0 : index
    %c0_26 = arith.constant 0 : index
    %46 = vector.load %arg2[%c0_25, %c0_26] : memref<32x128xbf16, #tpu.memory_space<vmem>>, vector<32x128xbf16>
    %cst_27 = arith.constant dense<0.000000e+00> : vector<8x128xf32>
    %47 = tpu.matmul %45, %46, %cst_27 {dimension_numbers = #tpu.dot_dimension_numbers<[1], [0], [0], [1], [0, 0, 1, 1], [], []>} : vector<8x32xbf16>, vector<32x128xbf16>, vector<8x128xf32> -> vector<8x128xf32>
    %c4 = arith.constant 4 : index
    %c0_28 = arith.constant 0 : index
    %48 = vector.load %arg3[%c4, %c0_28] : memref<8x128xf32, #tpu.memory_space<vmem>>, vector<1x128xf32>
    %49 = vector.shape_cast %48 : vector<1x128xf32> to vector<128xf32>
    %50 = vector.shape_cast %49 : vector<128xf32> to vector<1x128xf32>
    %51 = vector.broadcast %50 : vector<1x128xf32> to vector<8x128xf32>
    %52 = arith.addf %47, %51 : vector<8x128xf32>
    %cst_29 = arith.constant dense<0xFF800000> : vector<8xf32>
    %53 = vector.multi_reduction <maximumf>, %52, %cst_29 [1] : vector<8x128xf32> to vector<8xf32>
    %54 = vector.shape_cast %53 : vector<8xf32> to vector<8x1xf32>
    %55 = vector.broadcast %54 : vector<8x1xf32> to vector<8x128xf32>
    %56 = arith.subf %52, %55 : vector<8x128xf32>
    %57 = math.exp %56 : vector<8x128xf32>
    %cst_30 = arith.constant dense<0.000000e+00> : vector<8xf32>
    %58 = vector.multi_reduction <add>, %57, %cst_30 [1] : vector<8x128xf32> to vector<8xf32>
    %59 = vector.shape_cast %58 : vector<8xf32> to vector<8x1xf32>
    %60 = math.log %59 : vector<8x1xf32>
    %61 = vector.broadcast %60 : vector<8x1xf32> to vector<8x128xf32>
    %62 = arith.subf %56, %61 : vector<8x128xf32>
    %c0_31 = arith.constant 0 : index
    %c0_32 = arith.constant 0 : index
    %63 = vector.load %arg4[%c0_31, %c0_32] : memref<8x128xf32, #tpu.memory_space<vmem>>, vector<8x128xf32>
    tpu.vector_store %arg4[%c0_31, %c0_32], %62 {strides = array<i32>} : memref<8x128xf32, #tpu.memory_space<vmem>>, vector<8x128xf32>,
    return
  }
}

</mosaic_0001>

<llo_original>
// kernel: tpu_custom_call.1
$region0: #{tpu_custom_call.1}
  #allocation0 [shape = 'u32[]', space=smem, size = 0x4, offset = 0x4, fixed_abs, tag = 'smem constant byte address 0x4 - core index']
  #allocation1 [shape = 'u32[144,128]{1,0:T(1,128)}', space=vmem, size = 0x12000, scoped, tag = 'internal scratch']
  %s0 = inlined_call_operand.hbm [shape: f32[8,32], index: 0, kind: input, shape index: {}]
  %s1 = inlined_call_operand.hbm [shape: bf16[4,32,32], index: 1, kind: input, shape index: {}]
  %s2 = inlined_call_operand.hbm [shape: bf16[32,128], index: 2, kind: input, shape index: {}]
  %s3 = inlined_call_operand.vmem [shape: f32[8,128], index: 3, kind: input, shape index: {}]
  %s4 = inlined_call_operand.hbm [shape: f32[8,128], index: 4, kind: output, shape index: {}]
  %s5 = sld [smem:[#allocation0]]
  $region38: #{tpu_custom_call.1} parent=0
    _
  %s7 = ssub.s32 1, %s5
  %s8 = scalar_select 0, %s7, %s5
  $region1: #{tpu_custom_call.1} parent=0
    #allocation2 [shape = 'u8[4096]{0}', space=vmem, size = 0x1000, scoped, tag = 'input window, operand 0, single buffered']
    #allocation3 [shape = 's32[1]{0}', space=sflag, size = 0x4, scoped, tag = 'scoped memory for tpu_custom_call.1']
    #allocation4 [shape = 's32[1]{0}', space=sflag, size = 0x4, scoped, tag = 'scoped memory for tpu_custom_call.1']
    #allocation5 [shape = 'u8[32768]{0}', space=vmem, size = 0x8000, scoped, tag = 'input window, operand 1, single buffered']
    #allocation6 [shape = 's32[1]{0}', space=sflag, size = 0x4, scoped, tag = 'scoped memory for tpu_custom_call.1']
    #allocation7 [shape = 'u8[8192]{0}', space=vmem, size = 0x2000, scoped, tag = 'input window, operand 2, single buffered']
    #allocation8 [shape = 'u8[4096]{0}', space=vmem, size = 0x1000, scoped, tag = 'output window, operand 0, single buffered']
    %9 = vsyncpa [#allocation3], 0
    %10 = vsyncpa [#allocation6], 0
    %11 = vsyncpa [#allocation4], 0
    // Predicated region
    $region2: #{tpu_custom_call.1} parent=1 // pred_check
      _
    $region3: #{tpu_custom_call.1} parent=1 // pred_check_branch
      %13 = sbr.rel (0) target = $region5
    $region4: #{tpu_custom_call.1} parent=1 // pred_region
      %s15 = ssub.s32 128, 128
      %16 = vsyncadd [#allocation3], %s15
      %s18 = sshll.u32 [#allocation2], 4
      %s19 = int_to_ptr.vmem [resolvable:$true] %s18
      %21 = dma.hbm_to_vmem [thread:$0]  %s0, 128, %s19, [#allocation3]
    $region5: #{tpu_custom_call.1} parent=1 // pred_fallthru
      _
    // Predicated region
    $region6: #{tpu_custom_call.1} parent=1 // pred_check
      _
    $region7: #{tpu_custom_call.1} parent=1 // pred_check_branch
      %23 = sbr.rel (0) target = $region9
    $region8: #{tpu_custom_call.1} parent=1 // pred_region
      %s25 = ssub.s32 1024, 1024
      %26 = vsyncadd [#allocation6], %s25
      %s27 = sshll.u32 [#allocation5], 4
      %s28 = int_to_ptr.vmem [resolvable:$true] %s27
      %33 = dma.hbm_to_vmem [thread:$0]  %s1, 1024, %s28, [#allocation6], 64, 64, 4
    $region9: #{tpu_custom_call.1} parent=1 // pred_fallthru
      _
    // Predicated region
    $region10: #{tpu_custom_call.1} parent=1 // pred_check
      _
    $region11: #{tpu_custom_call.1} parent=1 // pred_check_branch
      %35 = sbr.rel (0) target = $region13
    $region12: #{tpu_custom_call.1} parent=1 // pred_region
      %s37 = ssub.s32 256, 256
      %38 = vsyncadd [#allocation6], %s37
      %s39 = sshll.u32 [#allocation7], 4
      %s40 = int_to_ptr.vmem [resolvable:$true] %s39
      %45 = dma.hbm_to_vmem [thread:$0]  %s2, 256, %s40, [#allocation6], 64, 64, 4
    $region13: #{tpu_custom_call.1} parent=1 // pred_fallthru
      _
    // Predicated region
    $region14: #{tpu_custom_call.1} parent=1 // pred_check
      _
    $region15: #{tpu_custom_call.1} parent=1 // pred_check_branch
      %47 = sbr.rel (0) target = $region17
    $region16: #{tpu_custom_call.1} parent=1 // pred_region
      _
    $region17: #{tpu_custom_call.1} parent=1 // pred_fallthru
      _
    // Predicated region
    $region18: #{tpu_custom_call.1} parent=1 // pred_check
      _
    $region19: #{tpu_custom_call.1} parent=1 // pred_check_branch
      %49 = sbr.rel (0) target = $region21
    $region20: #{tpu_custom_call.1} parent=1 // pred_region
      %50 = dma.done [#allocation3], 128
    $region21: #{tpu_custom_call.1} parent=1 // pred_fallthru
      _
    // Predicated region
    $region22: #{tpu_custom_call.1} parent=1 // pred_check
      _
    $region23: #{tpu_custom_call.1} parent=1 // pred_check_branch
      %52 = sbr.rel (0) target = $region25
    $region24: #{tpu_custom_call.1} parent=1 // pred_region
      %53 = dma.done [#allocation6], 1024
    $region25: #{tpu_custom_call.1} parent=1 // pred_fallthru
      _
    // Predicated region
    $region26: #{tpu_custom_call.1} parent=1 // pred_check
      _
    $region27: #{tpu_custom_call.1} parent=1 // pred_check_branch
      %55 = sbr.rel (0) target = $region29
    $region28: #{tpu_custom_call.1} parent=1 // pred_region
      %56 = dma.done [#allocation6], 256
    $region29: #{tpu_custom_call.1} parent=1 // pred_fallthru
      _
    %v58 = vld [vmem:[#allocation2] sm:$0xff]
    %v59 = vpack.c.bf16 %v58, %v58
    %v60 = vld [vmem:[#allocation5] sm:$0xf]
    %v61 = vld [vmem:[#allocation5 + $0x4] sm:$0xf]
    %v62 = vld [vmem:[#allocation5 + $0x8] sm:$0xf]
    %v63 = vld [vmem:[#allocation5 + $0xc] sm:$0xf]
    %v64 = vld [vmem:[%s3] sm:$0x1]
    %v65 = vlaneseq
    %v66 = vshrl.u32 %v65, 7
    %v67 = vsub.s32 0, %v66
    %v68 = vrot.slane %v64, %v67
    %v73 = vunpack.c.l.b16 %v60
    %v74 = vunpack.c.l.b16 %v61
    %v75 = vunpack.c.l.b16 %v62
    %v76 = vunpack.c.l.b16 %v63
    %v77 = vpack.c.b16 %v74, %v73
    %v78 = vpack.c.b16 %v76, %v75
    %vm81 = vcmask 261120
    %v83 = vsel %vm81, %v59, 0
    %85 = vmatprep.subr.bf16.mxu0 0
    %86 = vmatpush1.bf16.msra.mxu0 %v77
    %87 = vmatprep.subr.bf16.mxu0 0
    %88 = vmatpush1.bf16.msra.mxu0 %v78
    %89 = vmatprep.subr.bf16.mxu0 0
    %90 = vmatpush1.bf16.msra.mxu0 0
    %91 = vmatprep.subr.bf16.mxu0 0
    %92 = vmatpush1.bf16.msra.mxu0 0
    %93 = vmatprep.subr.bf16.mxu0 0
    %94 = vmatpush1.bf16.msra.mxu0 0
    %95 = vmatprep.subr.bf16.mxu0 0
    %96 = vmatpush1.bf16.msra.mxu0 0
    %97 = vmatprep.subr.bf16.mxu0 0
    %98 = vmatpush1.bf16.msra.mxu0 0
    %99 = vmatprep.subr.bf16.mxu0 0
    %100 = vmatpush1.bf16.msra.mxu0 0
    %101 = vmatprep.subr.bf16.mxu0 0
    %102 = vmatpush1.bf16.msra.mxu0 0
    %103 = vmatprep.subr.bf16.mxu0 0
    %104 = vmatpush1.bf16.msra.mxu0 0
    %105 = vmatprep.subr.bf16.mxu0 0
    %106 = vmatpush1.bf16.msra.mxu0 0
    %107 = vmatprep.subr.bf16.mxu0 0
    %108 = vmatpush1.bf16.msra.mxu0 0
    %109 = vmatprep.subr.bf16.mxu0 0
    %110 = vmatpush1.bf16.msra.mxu0 0
    %111 = vmatprep.subr.bf16.mxu0 0
    %112 = vmatpush1.bf16.msra.mxu0 0
    %113 = vmatprep.subr.bf16.mxu0 0
    %114 = vmatpush1.bf16.msra.mxu0 0
    %115 = vmatprep.subr.bf16.mxu0 0
    %116 = vmatpush1.bf16.msra.mxu0 0
    %117 = vmatprep.mubr.bf16.mxu0 0
    %118 = vmatmul.mubr.bf16.gmra.mrb[0].mxu0 %v83
    %v119 = vpop.f32.mrb[0].mxu0
    %v120 = vadd.f32 %v68, %v119
    %v121 = vpop.f32.mrb[0].mxu0
    %v122 = vpop.f32.mrb[0].mxu0
    %v123 = vpop.f32.mrb[0].mxu0
    %124 = vdwg.mxu0
    %v125 = vmax.f32 %v120, 0.0
    %v126 = vpack.c.bf16 %v125, %v125
    %s127 = scalar_lea.vmem [#allocation5], 16
    %v128 = vld [vmem:[%s127] sm:$0xf]
    %v129 = vld [vmem:[%s127 + $0x4] sm:$0xf]
    %v130 = vld [vmem:[%s127 + $0x8] sm:$0xf]
    %v131 = vld [vmem:[%s127 + $0xc] sm:$0xf]
    %v132 = vld [vmem:[%s3 + $0x1] sm:$0x1]
    %v133 = vlaneseq
    %v134 = vshrl.u32 %v133, 7
    %v135 = vsub.s32 0, %v134
    %v136 = vrot.slane %v132, %v135
    %v141 = vunpack.c.l.b16 %v128
    %v142 = vunpack.c.l.b16 %v129
    %v143 = vunpack.c.l.b16 %v130
    %v144 = vunpack.c.l.b16 %v131
    %v145 = vpack.c.b16 %v142, %v141
    %v146 = vpack.c.b16 %v144, %v143
    %v150 = vsel %vm81, %v126, 0
    %152 = vmatprep.subr.bf16.mxu0 0
    %153 = vmatpush1.bf16.msra.mxu0 %v145
    %154 = vmatprep.subr.bf16.mxu0 0
    %155 = vmatpush1.bf16.msra.mxu0 %v146
    %156 = vmatprep.subr.bf16.mxu0 0
    %157 = vmatpush1.bf16.msra.mxu0 0
    %158 = vmatprep.subr.bf16.mxu0 0
    %159 = vmatpush1.bf16.msra.mxu0 0
    %160 = vmatprep.subr.bf16.mxu0 0
    %161 = vmatpush1.bf16.msra.mxu0 0
    %162 = vmatprep.subr.bf16.mxu0 0
    %163 = vmatpush1.bf16.msra.mxu0 0
    %164 = vmatprep.subr.bf16.mxu0 0
    %165 = vmatpush1.bf16.msra.mxu0 0
    %166 = vmatprep.subr.bf16.mxu0 0
    %167 = vmatpush1.bf16.msra.mxu0 0
    %168 = vmatprep.subr.bf16.mxu0 0
    %169 = vmatpush1.bf16.msra.mxu0 0
    %170 = vmatprep.subr.bf16.mxu0 0
    %171 = vmatpush1.bf16.msra.mxu0 0
    %172 = vmatprep.subr.bf16.mxu0 0
    %173 = vmatpush1.bf16.msra.mxu0 0
    %174 = vmatprep.subr.bf16.mxu0 0
    %175 = vmatpush1.bf16.msra.mxu0 0
    %176 = vmatprep.subr.bf16.mxu0 0
    %177 = vmatpush1.bf16.msra.mxu0 0
    %178 = vmatprep.subr.bf16.mxu0 0
    %179 = vmatpush1.bf16.msra.mxu0 0
    %180 = vmatprep.subr.bf16.mxu0 0
    %181 = vmatpush1.bf16.msra.mxu0 0
    %182 = vmatprep.subr.bf16.mxu0 0
    %183 = vmatpush1.bf16.msra.mxu0 0
    %184 = vmatprep.mubr.bf16.mxu0 0
    %185 = vmatmul.mubr.bf16.gmra.mrb[0].mxu0 %v150
    %v186 = vpop.f32.mrb[0].mxu0
    %v187 = vadd.f32 %v136, %v186
    %v188 = vpop.f32.mrb[0].mxu0
    %v189 = vpop.f32.mrb[0].mxu0
    %v190 = vpop.f32.mrb[0].mxu0
    %191 = vdwg.mxu0
    %v192 = vmax.f32 %v187, 0.0
    %v193 = vpack.c.bf16 %v192, %v192
    %s194 = scalar_lea.vmem [#allocation5], 32
    %v195 = vld [vmem:[%s194] sm:$0xf]
    %v196 = vld [vmem:[%s194 + $0x4] sm:$0xf]
    %v197 = vld [vmem:[%s194 + $0x8] sm:$0xf]
    %v198 = vld [vmem:[%s194 + $0xc] sm:$0xf]
    %v199 = vld [vmem:[%s3 + $0x2] sm:$0x1]
    %v200 = vlaneseq
    %v201 = vshrl.u32 %v200, 7
    %v202 = vsub.s32 0, %v201
    %v203 = vrot.slane %v199, %v202
    %v208 = vunpack.c.l.b16 %v195
    %v209 = vunpack.c.l.b16 %v196
    %v210 = vunpack.c.l.b16 %v197
    %v211 = vunpack.c.l.b16 %v198
    %v212 = vpack.c.b16 %v209, %v208
    %v213 = vpack.c.b16 %v211, %v210
    %v217 = vsel %vm81, %v193, 0
    %219 = vmatprep.subr.bf16.mxu0 0
    %220 = vmatpush1.bf16.msra.mxu0 %v212
    %221 = vmatprep.subr.bf16.mxu0 0
    %222 = vmatpush1.bf16.msra.mxu0 %v213
    %223 = vmatprep.subr.bf16.mxu0 0
    %224 = vmatpush1.bf16.msra.mxu0 0
    %225 = vmatprep.subr.bf16.mxu0 0
    %226 = vmatpush1.bf16.msra.mxu0 0
    %227 = vmatprep.subr.bf16.mxu0 0
    %228 = vmatpush1.bf16.msra.mxu0 0
    %229 = vmatprep.subr.bf16.mxu0 0
    %230 = vmatpush1.bf16.msra.mxu0 0
    %231 = vmatprep.subr.bf16.mxu0 0
    %232 = vmatpush1.bf16.msra.mxu0 0
    %233 = vmatprep.subr.bf16.mxu0 0
    %234 = vmatpush1.bf16.msra.mxu0 0
    %235 = vmatprep.subr.bf16.mxu0 0
    %236 = vmatpush1.bf16.msra.mxu0 0
    %237 = vmatprep.subr.bf16.mxu0 0
    %238 = vmatpush1.bf16.msra.mxu0 0
    %239 = vmatprep.subr.bf16.mxu0 0
    %240 = vmatpush1.bf16.msra.mxu0 0
    %241 = vmatprep.subr.bf16.mxu0 0
    %242 = vmatpush1.bf16.msra.mxu0 0
    %243 = vmatprep.subr.bf16.mxu0 0
    %244 = vmatpush1.bf16.msra.mxu0 0
    %245 = vmatprep.subr.bf16.mxu0 0
    %246 = vmatpush1.bf16.msra.mxu0 0
    %247 = vmatprep.subr.bf16.mxu0 0
    %248 = vmatpush1.bf16.msra.mxu0 0
    %249 = vmatprep.subr.bf16.mxu0 0
    %250 = vmatpush1.bf16.msra.mxu0 0
    %251 = vmatprep.mubr.bf16.mxu0 0
    %252 = vmatmul.mubr.bf16.gmra.mrb[0].mxu0 %v217
    %v253 = vpop.f32.mrb[0].mxu0
    %v254 = vadd.f32 %v203, %v253
    %v255 = vpop.f32.mrb[0].mxu0
    %v256 = vpop.f32.mrb[0].mxu0
    %v257 = vpop.f32.mrb[0].mxu0
    %258 = vdwg.mxu0
    %v259 = vmax.f32 %v254, 0.0
    %v260 = vpack.c.bf16 %v259, %v259
    %s261 = scalar_lea.vmem [#allocation5], 48
    %v262 = vld [vmem:[%s261] sm:$0xf]
    %v263 = vld [vmem:[%s261 + $0x4] sm:$0xf]
    %v264 = vld [vmem:[%s261 + $0x8] sm:$0xf]
    %v265 = vld [vmem:[%s261 + $0xc] sm:$0xf]
    %v266 = vld [vmem:[%s3 + $0x3] sm:$0x1]
    %v267 = vlaneseq
    %v268 = vshrl.u32 %v267, 7
    %v269 = vsub.s32 0, %v268
    %v270 = vrot.slane %v266, %v269
    %v275 = vunpack.c.l.b16 %v262
    %v276 = vunpack.c.l.b16 %v263
    %v277 = vunpack.c.l.b16 %v264
    %v278 = vunpack.c.l.b16 %v265
    %v279 = vpack.c.b16 %v276, %v275
    %v280 = vpack.c.b16 %v278, %v277
    %v284 = vsel %vm81, %v260, 0
    %286 = vmatprep.subr.bf16.mxu0 0
    %287 = vmatpush1.bf16.msra.mxu0 %v279
    %288 = vmatprep.subr.bf16.mxu0 0
    %289 = vmatpush1.bf16.msra.mxu0 %v280
    %290 = vmatprep.subr.bf16.mxu0 0
    %291 = vmatpush1.bf16.msra.mxu0 0
    %292 = vmatprep.subr.bf16.mxu0 0
    %293 = vmatpush1.bf16.msra.mxu0 0
    %294 = vmatprep.subr.bf16.mxu0 0
    %295 = vmatpush1.bf16.msra.mxu0 0
    %296 = vmatprep.subr.bf16.mxu0 0
    %297 = vmatpush1.bf16.msra.mxu0 0
    %298 = vmatprep.subr.bf16.mxu0 0
    %299 = vmatpush1.bf16.msra.mxu0 0
    %300 = vmatprep.subr.bf16.mxu0 0
    %301 = vmatpush1.bf16.msra.mxu0 0
    %302 = vmatprep.subr.bf16.mxu0 0
    %303 = vmatpush1.bf16.msra.mxu0 0
    %304 = vmatprep.subr.bf16.mxu0 0
    %305 = vmatpush1.bf16.msra.mxu0 0
    %306 = vmatprep.subr.bf16.mxu0 0
    %307 = vmatpush1.bf16.msra.mxu0 0
    %308 = vmatprep.subr.bf16.mxu0 0
    %309 = vmatpush1.bf16.msra.mxu0 0
    %310 = vmatprep.subr.bf16.mxu0 0
    %311 = vmatpush1.bf16.msra.mxu0 0
    %312 = vmatprep.subr.bf16.mxu0 0
    %313 = vmatpush1.bf16.msra.mxu0 0
    %314 = vmatprep.subr.bf16.mxu0 0
    %315 = vmatpush1.bf16.msra.mxu0 0
    %316 = vmatprep.subr.bf16.mxu0 0
    %317 = vmatpush1.bf16.msra.mxu0 0
    %318 = vmatprep.mubr.bf16.mxu0 0
    %319 = vmatmul.mubr.bf16.gmra.mrb[0].mxu0 %v284
    %v320 = vpop.f32.mrb[0].mxu0
    %v321 = vadd.f32 %v270, %v320
    %v322 = vpop.f32.mrb[0].mxu0
    %v323 = vpop.f32.mrb[0].mxu0
    %v324 = vpop.f32.mrb[0].mxu0
    %325 = vdwg.mxu0
    %v326 = vmax.f32 %v321, 0.0
    %v327 = vpack.c.bf16 %v326, %v326
    %v328 = vld [vmem:[#allocation7] sm:$0xf]
    %v329 = vld [vmem:[#allocation7 + $0x4] sm:$0xf]
    %v330 = vld [vmem:[#allocation7 + $0x8] sm:$0xf]
    %v331 = vld [vmem:[#allocation7 + $0xc] sm:$0xf]
    %v332 = vld [vmem:[%s3 + $0x4] sm:$0x1]
    %v333 = vlaneseq
    %v334 = vshrl.u32 %v333, 7
    %v335 = vsub.s32 0, %v334
    %v336 = vrot.slane %v332, %v335
    %v341 = vunpack.c.l.b16 %v328
    %v342 = vunpack.c.l.b16 %v329
    %v343 = vunpack.c.l.b16 %v330
    %v344 = vunpack.c.l.b16 %v331
    %v345 = vpack.c.b16 %v342, %v341
    %v346 = vpack.c.b16 %v344, %v343
    %v350 = vsel %vm81, %v327, 0
    %352 = vmatprep.subr.bf16.mxu0 0
    %353 = vmatpush1.bf16.msra.mxu0 %v345
    %354 = vmatprep.subr.bf16.mxu0 0
    %355 = vmatpush1.bf16.msra.mxu0 %v346
    %356 = vmatprep.subr.bf16.mxu0 0
    %357 = vmatpush1.bf16.msra.mxu0 0
    %358 = vmatprep.subr.bf16.mxu0 0
    %359 = vmatpush1.bf16.msra.mxu0 0
    %360 = vmatprep.subr.bf16.mxu0 0
    %361 = vmatpush1.bf16.msra.mxu0 0
    %362 = vmatprep.subr.bf16.mxu0 0
    %363 = vmatpush1.bf16.msra.mxu0 0
    %364 = vmatprep.subr.bf16.mxu0 0
    %365 = vmatpush1.bf16.msra.mxu0 0
    %366 = vmatprep.subr.bf16.mxu0 0
    %367 = vmatpush1.bf16.msra.mxu0 0
    %368 = vmatprep.subr.bf16.mxu0 0
    %369 = vmatpush1.bf16.msra.mxu0 0
    %370 = vmatprep.subr.bf16.mxu0 0
    %371 = vmatpush1.bf16.msra.mxu0 0
    %372 = vmatprep.subr.bf16.mxu0 0
    %373 = vmatpush1.bf16.msra.mxu0 0
    %374 = vmatprep.subr.bf16.mxu0 0
    %375 = vmatpush1.bf16.msra.mxu0 0
    %376 = vmatprep.subr.bf16.mxu0 0
    %377 = vmatpush1.bf16.msra.mxu0 0
    %378 = vmatprep.subr.bf16.mxu0 0
    %379 = vmatpush1.bf16.msra.mxu0 0
    %380 = vmatprep.subr.bf16.mxu0 0
    %381 = vmatpush1.bf16.msra.mxu0 0
    %382 = vmatprep.subr.bf16.mxu0 0
    %383 = vmatpush1.bf16.msra.mxu0 0
    %384 = vmatprep.mubr.bf16.mxu0 0
    %385 = vmatmul.mubr.bf16.gmra.mrb[0].mxu0 %v350
    %v386 = vpop.f32.mrb[0].mxu0
    %v387 = vadd.f32 %v336, %v386
    %v388 = vpop.f32.mrb[0].mxu0
    %v389 = vpop.f32.mrb[0].mxu0
    %v390 = vpop.f32.mrb[0].mxu0
    %391 = vdwg.mxu0
    %392 = vmax.xlane.f32.xlu0 %v387
    %v393 = vpop.xlane.xlu0 %392
    %v394 = vsub.f32 %v387, %v393
    %v395 = vmul.f32 %v394, 1.442695
    %v396 = vpow.pop %v395
    %397 = vadd.xlane.f32.xlu0 %v396
    %v398 = vpop.xlane.xlu0 %397
    %v399 = vlog2.pop %v398
    %v400 = vmul.f32 %v399, 0.6931472
    %v401 = vsub.f32 %v394, %v400
    %402 = vst [vmem:[#allocation8] sm:$0xff] %v401
    // Predicated region
    $region30: #{tpu_custom_call.1} parent=1 // pred_check
      _
    $region31: #{tpu_custom_call.1} parent=1 // pred_check_branch
      %404 = sbr.rel (0) target = $region33
    $region32: #{tpu_custom_call.1} parent=1 // pred_region
      %s406 = ssub.s32 128, 128
      %407 = vsyncadd [#allocation4], %s406
      %s409 = sshll.u32 [#allocation8], 4
      %s410 = int_to_ptr.vmem [resolvable:$true] %s409
      %412 = dma.vmem_to_hbm [thread:$0]  %s410, 128, %s4, [#allocation4]
    $region33: #{tpu_custom_call.1} parent=1 // pred_fallthru
      _
    // Predicated region
    $region34: #{tpu_custom_call.1} parent=1 // pred_check
      _
    $region35: #{tpu_custom_call.1} parent=1 // pred_check_branch
      %414 = sbr.rel (0) target = $region37
    $region36: #{tpu_custom_call.1} parent=1 // pred_region
      %415 = dma.done [#allocation4], 128
    $region37: #{tpu_custom_call.1} parent=1 // pred_fallthru
      _
    %416 = vsyncpa [#allocation3], 1
    %417 = vsyncpa [#allocation6], 1
    %418 = vsyncpa [#allocation4], 1

</llo_original>
